<compile_context>
chip_gen: v7x
topology: tpu7x:2x2x1
jax: 0.10.0
libtpu: 0.0.40
codegen_flags: <defaults>
</compile_context>

<pallas_src>
import jax
import jax.numpy as jnp
from jax.experimental import pallas as pl
from jax.experimental.pallas import tpu as pltpu


def _gat_kernel(x_ref, wl_ref, wr_ref, attw_ref, adj_ref, o_ref):
    # x_ref:    (1, S, F_in)  this batch element's input
    # wl_ref:   (N, F_in)     linear_l.weight (PyTorch [out, in] layout)
    # wr_ref:   (N, F_in)     linear_r.weight
    # attw_ref: (1, S)        attn.weight (nn.Linear(seq_len, 1, bias=False))
    # adj_ref:  (N, N)        adjacency (entries <= 0 are masked)
    # o_ref:    (1, N, S)     output
    x = x_ref[0]                                          # [S, F_in]

    # Projections directly in the permuted [N, S] layout:
    # gl[n, t] = sum_f W_l[n, f] * x[t, f]   (MXU, f32 accumulation).
    gl = jnp.einsum("nf,sf->ns", wl_ref[...], x,
                    preferred_element_type=jnp.float32)   # [N, S]
    gr = jnp.einsum("nf,sf->ns", wr_ref[...], x,
                    preferred_element_type=jnp.float32)   # [N, S]

    # Pairwise combination + LeakyReLU(0.2) + contraction with attn vector.
    comb = gr[:, None, :] + gl[None, :, :]                # [N, N, S]
    comb = jnp.where(comb >= 0, comb, 0.2 * comb)         # LeakyReLU(0.2)
    e = jnp.sum(comb * attw_ref[...][None], axis=-1)      # [N, N]

    # Adjacency mask + numerically-stable softmax over the last axis.
    e = jnp.where(adj_ref[...] > 0, e, jnp.float32(-9e15))
    e = e - jnp.max(e, axis=-1, keepdims=True)
    p = jnp.exp(e)
    att = p / jnp.sum(p, axis=-1, keepdims=True)          # [N, N]
    # TODO(synk): Dropout(p=0.6) on `att` omitted (inference semantics); with
    # it off every head is identical, so the head-mean is a no-op.

    h = jnp.dot(att, gr, preferred_element_type=jnp.float32)   # [N, S]
    o_ref[0] = h.astype(o_ref.dtype)


@jax.jit
def graph_attention_forward(x, w_l, w_r, attn_w, adj):
    """GraphAttentionLayer forward (eval mode).

    x:      [B, seq_len, in_features]
    w_l:    [out_features, in_features]   (linear_l.weight)
    w_r:    [out_features, in_features]   (linear_r.weight)
    attn_w: [1, seq_len]                  (attn.weight)
    adj:    [out_features, out_features]  adjacency / mask
    returns [B, out_features, seq_len]
    """
    B, S, F_in = x.shape
    N = w_l.shape[0]

    cost = pl.CostEstimate(
        flops=B * (2 * 2 * N * F_in * S      # two projections
                   + 4 * N * N * S           # pairwise add/lrelu/mul/reduce
                   + 2 * N * N * S),          # attention @ gr
        transcendentals=B * N * N,            # exp in softmax
        bytes_accessed=4 * (x.size + w_l.size + w_r.size + attn_w.size
                            + adj.size + B * N * S),
    )

    return pl.pallas_call(
        _gat_kernel,
        out_shape=jax.ShapeDtypeStruct((B, N, S), x.dtype),
        grid_spec=pltpu.PrefetchScalarGridSpec(
            num_scalar_prefetch=0,
            grid=(B,),
            in_specs=[
                pl.BlockSpec((1, S, F_in), lambda b: (b, 0, 0)),  # per-batch x
                pl.BlockSpec((N, F_in), lambda b: (0, 0)),        # resident W_l
                pl.BlockSpec((N, F_in), lambda b: (0, 0)),        # resident W_r
                pl.BlockSpec((1, S), lambda b: (0, 0)),           # resident attn w
                pl.BlockSpec((N, N), lambda b: (0, 0)),           # resident adj
            ],
            out_specs=pl.BlockSpec((1, N, S), lambda b: (b, 0, 0)),
        ),
        compiler_params=pltpu.CompilerParams(
            dimension_semantics=("parallel",),
        ),
        cost_estimate=cost,
    )(x, w_l, w_r, attn_w, adj)


def _reference(x, w_l, w_r, attn_w, adj):
    # Pure-JAX reference mirroring the PyTorch forward (eval mode).
    hp = jax.lax.Precision.HIGHEST
    g_l = jnp.einsum("bsf,nf->bsn", x, w_l, precision=hp)
    g_r = jnp.einsum("bsf,nf->bsn", x, w_r, precision=hp)
    gl = jnp.transpose(g_l, (0, 2, 1))                    # [B, N, S]
    gr = jnp.transpose(g_r, (0, 2, 1))                    # [B, N, S]
    comb = gr[:, :, None, :] + gl[:, None, :, :]          # [B, N, N, S]
    comb = jnp.where(comb >= 0, comb, 0.2 * comb)
    e = jnp.einsum("bijt,t->bij", comb, attn_w[0], precision=hp)
    e = jnp.where(adj[None] > 0, e, -9e15)
    att = jax.nn.softmax(e, axis=-1)
    h = jnp.einsum("bij,bjt->bit", att, gr, precision=hp)
    return h.astype(x.dtype)


if __name__ == "__main__":
    key = jax.random.PRNGKey(0)
    k_x, k_wl, k_wr, k_a, k_adj = jax.random.split(key, 5)

    # Small shapes consistent with the module's constructor.
    B, seq_len, in_features, out_features = 2, 16, 8, 8
    n_heads = 2  # heads share weights; with dropout off the mean is a no-op
    N = out_features

    x = jax.random.normal(k_x, (B, seq_len, in_features), dtype=jnp.float32)

    bound_w = 1.0 / (in_features ** 0.5)
    w_l = jax.random.uniform(k_wl, (out_features, in_features), jnp.float32,
                             minval=-bound_w, maxval=bound_w)
    w_r = jax.random.uniform(k_wr, (out_features, in_features), jnp.float32,
                             minval=-bound_w, maxval=bound_w)
    bound_a = 1.0 / (seq_len ** 0.5)
    attn_w = jax.random.uniform(k_a, (1, seq_len), jnp.float32,
                                minval=-bound_a, maxval=bound_a)

    # Random 0/1 adjacency over the N = out_features "nodes", with self-loops.
    adj = (jax.random.uniform(k_adj, (N, N)) > 0.5).astype(jnp.float32)
    adj = jnp.maximum(adj, jnp.eye(N, dtype=jnp.float32))

    y = graph_attention_forward(x, w_l, w_r, attn_w, adj)
    y = jax.block_until_ready(y)

    y_ref = _reference(x, w_l, w_r, attn_w, adj)
    assert y.shape == (B, out_features, seq_len), y.shape
    assert jnp.allclose(y, y_ref, atol=1e-4, rtol=1e-4), (
        "mismatch vs reference, max abs err = %g"
        % float(jnp.max(jnp.abs(y - y_ref))))

    print("KERNEL_OK")
</pallas_src>

<mosaic_0001>
module attributes {stable_mosaic.version = 11 : i64} {
  func.func @_gat_kernel(%arg0: i32, %arg1: memref<1x16x8xf32, #tpu.memory_space<vmem>>, %arg2: memref<8x8xf32, #tpu.memory_space<vmem>>, %arg3: memref<8x8xf32, #tpu.memory_space<vmem>>, %arg4: memref<1x16xf32, #tpu.memory_space<vmem>>, %arg5: memref<8x8xf32, #tpu.memory_space<vmem>>, %arg6: memref<1x8x16xf32, #tpu.memory_space<vmem>>) attributes {dimension_semantics = [#tpu.dimension_semantics<parallel>], iteration_bounds = array<i64: 2>, scalar_prefetch = 0 : i64, scratch_operands = 0 : i64, tpu.core_type = #tpu.core_type<tc>, window_params = [{transform_indices = @transform_0, window_bounds = array<i64: 1, 16, 8>}, {pipeline_mode = #tpu.pipeline_mode<synchronous>, transform_indices = @transform_1, window_bounds = array<i64: 8, 8>}, {pipeline_mode = #tpu.pipeline_mode<synchronous>, transform_indices = @transform_2, window_bounds = array<i64: 8, 8>}, {pipeline_mode = #tpu.pipeline_mode<synchronous>, transform_indices = @transform_3, window_bounds = array<i64: 1, 16>}, {pipeline_mode = #tpu.pipeline_mode<synchronous>, transform_indices = @transform_4, window_bounds = array<i64: 8, 8>}, {transform_indices = @transform_5, window_bounds = array<i64: 1, 8, 16>}]} {
    %c0 = arith.constant 0 : index
    %c0_0 = arith.constant 0 : index
    %c0_1 = arith.constant 0 : index
    %0 = vector.load %arg1[%c0, %c0_0, %c0_1] : memref<1x16x8xf32, #tpu.memory_space<vmem>>, vector<1x16x8xf32>
    %1 = vector.shape_cast %0 : vector<1x16x8xf32> to vector<16x8xf32>
    %c0_2 = arith.constant 0 : index
    %c0_3 = arith.constant 0 : index
    %2 = vector.load %arg2[%c0_2, %c0_3] : memref<8x8xf32, #tpu.memory_space<vmem>>, vector<8x8xf32>
    "tpu.trace_start"() <{level = 10 : i32, message = "nf,sf->ns"}> : () -> ()
    %cst = arith.constant dense<0.000000e+00> : vector<8x16xf32>
    %3 = tpu.matmul %2, %1, %cst {dimension_numbers = #tpu.dot_dimension_numbers<[1], [1], [0], [0], [0, 0, 1, 0], [], []>} : vector<8x8xf32>, vector<16x8xf32>, vector<8x16xf32> -> vector<8x16xf32>
    "tpu.trace_stop"() : () -> ()
    %c0_4 = arith.constant 0 : index
    %c0_5 = arith.constant 0 : index
    %4 = vector.load %arg3[%c0_4, %c0_5] : memref<8x8xf32, #tpu.memory_space<vmem>>, vector<8x8xf32>
    "tpu.trace_start"() <{level = 10 : i32, message = "nf,sf->ns"}> : () -> ()
    %cst_6 = arith.constant dense<0.000000e+00> : vector<8x16xf32>
    %5 = tpu.matmul %4, %1, %cst_6 {dimension_numbers = #tpu.dot_dimension_numbers<[1], [1], [0], [0], [0, 0, 1, 0], [], []>} : vector<8x8xf32>, vector<16x8xf32>, vector<8x16xf32> -> vector<8x16xf32>
    "tpu.trace_stop"() : () -> ()
    %6 = vector.shape_cast %5 : vector<8x16xf32> to vector<8x1x16xf32>
    %7 = vector.shape_cast %3 : vector<8x16xf32> to vector<1x8x16xf32>
    %8 = vector.broadcast %6 : vector<8x1x16xf32> to vector<8x8x16xf32>
    %9 = vector.broadcast %7 : vector<1x8x16xf32> to vector<8x8x16xf32>
    %10 = arith.addf %8, %9 : vector<8x8x16xf32>
    %cst_7 = arith.constant 0.000000e+00 : f32
    %11 = vector.broadcast %cst_7 : f32 to vector<8x8x16xf32>
    %12 = arith.cmpf oge, %10, %11 : vector<8x8x16xf32>
    %cst_8 = arith.constant 2.000000e-01 : f32
    %13 = vector.broadcast %cst_8 : f32 to vector<8x8x16xf32>
    %14 = arith.mulf %13, %10 : vector<8x8x16xf32>
    %15 = arith.select %12, %10, %14 : vector<8x8x16xi1>, vector<8x8x16xf32>
    %c0_9 = arith.constant 0 : index
    %c0_10 = arith.constant 0 : index
    %16 = vector.load %arg4[%c0_9, %c0_10] : memref<1x16xf32, #tpu.memory_space<vmem>>, vector<1x16xf32>
    %17 = vector.shape_cast %16 : vector<1x16xf32> to vector<1x1x16xf32>
    %18 = vector.broadcast %17 : vector<1x1x16xf32> to vector<8x8x16xf32>
    %19 = arith.mulf %15, %18 : vector<8x8x16xf32>
    %cst_11 = arith.constant dense<0.000000e+00> : vector<8x8xf32>
    %20 = vector.multi_reduction <add>, %19, %cst_11 [2] : vector<8x8x16xf32> to vector<8x8xf32>
    %c0_12 = arith.constant 0 : index
    %c0_13 = arith.constant 0 : index
    %21 = vector.load %arg5[%c0_12, %c0_13] : memref<8x8xf32, #tpu.memory_space<vmem>>, vector<8x8xf32>
    %cst_14 = arith.constant 0.000000e+00 : f32
    %22 = vector.broadcast %cst_14 : f32 to vector<8x8xf32>
    %23 = arith.cmpf ogt, %21, %22 : vector<8x8xf32>
    %cst_15 = arith.constant -9.000000e+15 : f32
    %24 = vector.broadcast %cst_15 : f32 to vector<8x8xf32>
    %25 = arith.select %23, %20, %24 : vector<8x8xi1>, vector<8x8xf32>
    %cst_16 = arith.constant dense<0xFF800000> : vector<8xf32>
    %26 = vector.multi_reduction <maximumf>, %25, %cst_16 [1] : vector<8x8xf32> to vector<8xf32>
    %27 = vector.shape_cast %26 : vector<8xf32> to vector<8x1xf32>
    %28 = vector.broadcast %27 : vector<8x1xf32> to vector<8x8xf32>
    %29 = arith.subf %25, %28 : vector<8x8xf32>
    %30 = math.exp %29 : vector<8x8xf32>
    %cst_17 = arith.constant dense<0.000000e+00> : vector<8xf32>
    %31 = vector.multi_reduction <add>, %30, %cst_17 [1] : vector<8x8xf32> to vector<8xf32>
    %32 = vector.shape_cast %31 : vector<8xf32> to vector<8x1xf32>
    %33 = vector.broadcast %32 : vector<8x1xf32> to vector<8x8xf32>
    %34 = arith.divf %30, %33 : vector<8x8xf32>
    %cst_18 = arith.constant dense<0.000000e+00> : vector<8x16xf32>
    %35 = tpu.matmul %34, %5, %cst_18 {dimension_numbers = #tpu.dot_dimension_numbers<[1], [0], [0], [1], [0, 0, 1, 1], [], []>} : vector<8x8xf32>, vector<8x16xf32>, vector<8x16xf32> -> vector<8x16xf32>
    %c0_19 = arith.constant 0 : index
    %c0_20 = arith.constant 0 : index
    %c0_21 = arith.constant 0 : index
    %36 = vector.load %arg6[%c0_19, %c0_20, %c0_21] : memref<1x8x16xf32, #tpu.memory_space<vmem>>, vector<1x8x16xf32>
    %37 = vector.shape_cast %36 : vector<1x8x16xf32> to vector<8x16xf32>
    %38 = vector.shape_cast %35 : vector<8x16xf32> to vector<1x8x16xf32>
    tpu.vector_store %arg6[%c0_19, %c0_20, %c0_21], %38 {strides = array<i32>} : memref<1x8x16xf32, #tpu.memory_space<vmem>>, vector<1x8x16xf32>,
    return
  }
  func.func @transform_0(%arg0: i32) -> (i32, i32, i32) {
    %c0_i32 = arith.constant 0 : i32
    %c0_i32_0 = arith.constant 0 : i32
    %c0_i32_1 = arith.constant 0 : i32
    return %arg0, %c0_i32, %c0_i32_0 : i32, i32, i32
  }
  func.func @transform_1(%arg0: i32) -> (i32, i32) {
    %c0_i32 = arith.constant 0 : i32
    %c0_i32_0 = arith.constant 0 : i32
    %c0_i32_1 = arith.constant 0 : i32
    return %c0_i32, %c0_i32_0 : i32, i32
  }
  func.func @transform_2(%arg0: i32) -> (i32, i32) {
    %c0_i32 = arith.constant 0 : i32
    %c0_i32_0 = arith.constant 0 : i32
    %c0_i32_1 = arith.constant 0 : i32
    return %c0_i32, %c0_i32_0 : i32, i32
  }
  func.func @transform_3(%arg0: i32) -> (i32, i32) {
    %c0_i32 = arith.constant 0 : i32
    %c0_i32_0 = arith.constant 0 : i32
    %c0_i32_1 = arith.constant 0 : i32
    return %c0_i32, %c0_i32_0 : i32, i32
  }
  func.func @transform_4(%arg0: i32) -> (i32, i32) {
    %c0_i32 = arith.constant 0 : i32
    %c0_i32_0 = arith.constant 0 : i32
    %c0_i32_1 = arith.constant 0 : i32
    return %c0_i32, %c0_i32_0 : i32, i32
  }
  func.func @transform_5(%arg0: i32) -> (i32, i32, i32) {
    %c0_i32 = arith.constant 0 : i32
    %c0_i32_0 = arith.constant 0 : i32
    %c0_i32_1 = arith.constant 0 : i32
    return %arg0, %c0_i32, %c0_i32_0 : i32, i32, i32
  }
}

</mosaic_0001>

<llo_original>
// kernel: graph_attention_forward.1
$region0: #{graph_attention_forward.1}
  #allocation0 [shape = 'u32[]', space=smem, size = 0x4, offset = 0x4, fixed_abs, tag = 'smem constant byte address 0x4 - core index']
  #allocation1 [shape = 'u32[144,128]{1,0:T(1,128)}', space=vmem, size = 0x12000, scoped, tag = 'internal scratch']
  %s0 = inlined_call_operand.vmem [shape: f32[2,16,8], index: 0, kind: input, shape index: {}]
  %s1 = inlined_call_operand.vmem [shape: f32[8,8], index: 1, kind: input, shape index: {}]
  %s2 = inlined_call_operand.vmem [shape: f32[8,8], index: 2, kind: input, shape index: {}]
  %s3 = inlined_call_operand.vmem [shape: f32[1,16], index: 3, kind: input, shape index: {}]
  %s4 = inlined_call_operand.vmem [shape: f32[8,8], index: 4, kind: input, shape index: {}]
  %s5 = inlined_call_operand.hbm [shape: f32[2,8,16], index: 5, kind: output, shape index: {}]
  %s6 = sld [smem:[#allocation0]]
  $region53: #{graph_attention_forward.1} parent=0
    _
  %s8 = ssub.s32 1, %s6
  %s9 = scalar_select 0, %s8, %s6
  $region1: #{graph_attention_forward.1} parent=0
    #allocation2 [shape = 'u8[8192]{0}', space=vmem, size = 0x2000, scoped, tag = 'output window, operand 0']
    #allocation3 [shape = 's32[2]{0}', space=sflag, size = 0x8, scoped, tag = 'scoped memory for graph_attention_forward.1']
    %10 = vsyncpa [#allocation3], 0
    %s11 = scalar_lea.sflag [#allocation3], 1
    %12 = vsyncpa %s11, 0
    loop: start=0, step=1, limit=4
    $region2: #{graph_attention_forward.1} parent=1 // loop_pre_header
      _
    $region3: #{graph_attention_forward.1} parent=1 // loop_header
      %s14 = sphi 0, %s18
      %p15 = scmp.ge.s32.totalorder %s14, 4
      %s24 = sphi 0, %s26
      %s27 = sphi 0, %s24
      %s28 = sphi 0, %s27
      %s44 = sphi 0, %s28
      %s48 = sphi 0, %s48
      %s50 = sphi 0, %s48
      %s51 = sphi 0, %s50
      %s65 = sphi 0, %s51
      %s69 = sphi 0, %s69
      %s71 = sphi 0, %s69
      %s72 = sphi 0, %s71
      %s86 = sphi 0, %s72
      %s90 = sphi 0, %s90
      %s92 = sphi 0, %s90
      %s93 = sphi 0, %s92
      %s107 = sphi 0, %s93
      %s111 = sphi 0, %s111
      %s113 = sphi 0, %s111
      %s114 = sphi 0, %s113
      %s128 = sphi 0, %s114
      %s134 = sphi 0, %s136
      %s137 = sphi 0, %s134
      %s138 = sphi 0, %s137
      %s154 = sphi 0, %s138
    $region4: #{graph_attention_forward.1} parent=1 // loop_header_branch
      %17 = sbr.rel (%p15) target = $region8
    $region5: #{graph_attention_forward.1} parent=1 // loop_body
      %s19 = ssub.s32 %s14, 1
      %s20 = ssub.s32 %s14, 2
      %s21 = sadd.s32 %s14, 1
      %s22 = ssub.s32 %s14, %s21
      %p23 = scmp.eq.s32.totalorder %s22, 0
      %s25 = sadd.s32 %s24, 1
      %s26 = scalar_select %p23, %s24, %s25
      %p29 = pneg %p23
      %p30 = scmp.eq.s32.totalorder %s14, 1
      %p31 = por %p29, %p30
      %p32 = scmp.ne.s32.totalorder %s24, %s27
      %p33 = scmp.eq.s32.totalorder %s14, 0
      %p34 = por %p32, %p33
      %p35 = scmp.ne.s32.totalorder %s24, %s27
      %p36 = scmp.eq.s32.totalorder %s19, 1
      %p37 = por %p35, %p36
      %p38 = scmp.ne.s32.totalorder %s27, %s28
      %p39 = scmp.eq.s32.totalorder %s19, 0
      %p40 = por %p38, %p39
      %p41 = scmp.ne.s32.totalorder %s27, %s28
      %p42 = scmp.eq.s32.totalorder %s20, 1
      %p43 = por %p41, %p42
      %p45 = scmp.ne.s32.totalorder %s28, %s44
      %p46 = scmp.eq.s32.totalorder %s20, 0
      %p47 = por %p45, %p46
      %s49 = sadd.s32 %s48, 1
      %p52 = scmp.eq.s32.totalorder %s14, 1
      %p53 = scmp.ne.s32.totalorder %s48, %s50
      %p54 = scmp.eq.s32.totalorder %s14, 0
      %p55 = por %p53, %p54
      %p56 = scmp.ne.s32.totalorder %s48, %s50
      %p57 = scmp.eq.s32.totalorder %s19, 1
      %p58 = por %p56, %p57
      %p59 = scmp.ne.s32.totalorder %s50, %s51
      %p60 = scmp.eq.s32.totalorder %s19, 0
      %p61 = por %p59, %p60
      %p62 = scmp.ne.s32.totalorder %s50, %s51
      %p63 = scmp.eq.s32.totalorder %s20, 1
      %p64 = por %p62, %p63
      %p66 = scmp.ne.s32.totalorder %s51, %s65
      %p67 = scmp.eq.s32.totalorder %s20, 0
      %p68 = por %p66, %p67
      %s70 = sadd.s32 %s69, 1
      %p73 = scmp.eq.s32.totalorder %s14, 1
      %p74 = scmp.ne.s32.totalorder %s69, %s71
      %p75 = scmp.eq.s32.totalorder %s14, 0
      %p76 = por %p74, %p75
      %p77 = scmp.ne.s32.totalorder %s69, %s71
      %p78 = scmp.eq.s32.totalorder %s19, 1
      %p79 = por %p77, %p78
      %p80 = scmp.ne.s32.totalorder %s71, %s72
      %p81 = scmp.eq.s32.totalorder %s19, 0
      %p82 = por %p80, %p81
      %p83 = scmp.ne.s32.totalorder %s71, %s72
      %p84 = scmp.eq.s32.totalorder %s20, 1
      %p85 = por %p83, %p84
      %p87 = scmp.ne.s32.totalorder %s72, %s86
      %p88 = scmp.eq.s32.totalorder %s20, 0
      %p89 = por %p87, %p88
      %s91 = sadd.s32 %s90, 1
      %p94 = scmp.eq.s32.totalorder %s14, 1
      %p95 = scmp.ne.s32.totalorder %s90, %s92
      %p96 = scmp.eq.s32.totalorder %s14, 0
      %p97 = por %p95, %p96
      %p98 = scmp.ne.s32.totalorder %s90, %s92
      %p99 = scmp.eq.s32.totalorder %s19, 1
      %p100 = por %p98, %p99
      %p101 = scmp.ne.s32.totalorder %s92, %s93
      %p102 = scmp.eq.s32.totalorder %s19, 0
      %p103 = por %p101, %p102
      %p104 = scmp.ne.s32.totalorder %s92, %s93
      %p105 = scmp.eq.s32.totalorder %s20, 1
      %p106 = por %p104, %p105
      %p108 = scmp.ne.s32.totalorder %s93, %s107
      %p109 = scmp.eq.s32.totalorder %s20, 0
      %p110 = por %p108, %p109
      %s112 = sadd.s32 %s111, 1
      %p115 = scmp.eq.s32.totalorder %s14, 1
      %p116 = scmp.ne.s32.totalorder %s111, %s113
      %p117 = scmp.eq.s32.totalorder %s14, 0
      %p118 = por %p116, %p117
      %p119 = scmp.ne.s32.totalorder %s111, %s113
      %p120 = scmp.eq.s32.totalorder %s19, 1
      %p121 = por %p119, %p120
      %p122 = scmp.ne.s32.totalorder %s113, %s114
      %p123 = scmp.eq.s32.totalorder %s19, 0
      %p124 = por %p122, %p123
      %p125 = scmp.ne.s32.totalorder %s113, %s114
      %p126 = scmp.eq.s32.totalorder %s20, 1
      %p127 = por %p125, %p126
      %p129 = scmp.ne.s32.totalorder %s114, %s128
      %p130 = scmp.eq.s32.totalorder %s20, 0
      %p131 = por %p129, %p130
      %s132 = ssub.s32 %s14, %s21
      %p133 = scmp.eq.s32.totalorder %s132, 0
      %s135 = sadd.s32 %s134, 1
      %s136 = scalar_select %p133, %s134, %s135
      %p139 = pneg %p133
      %p140 = scmp.eq.s32.totalorder %s14, 1
      %p141 = por %p139, %p140
      %p142 = scmp.ne.s32.totalorder %s134, %s137
      %p143 = scmp.eq.s32.totalorder %s14, 0
      %p144 = por %p142, %p143
      %p145 = scmp.ne.s32.totalorder %s134, %s137
      %p146 = scmp.eq.s32.totalorder %s19, 1
      %p147 = por %p145, %p146
      %p148 = scmp.ne.s32.totalorder %s137, %s138
      %p149 = scmp.eq.s32.totalorder %s19, 0
      %p150 = por %p148, %p149
      %p151 = scmp.ne.s32.totalorder %s137, %s138
      %p152 = scmp.eq.s32.totalorder %s20, 1
      %p153 = por %p151, %p152
      %p155 = scmp.ne.s32.totalorder %s138, %s154
      %p156 = scmp.eq.s32.totalorder %s20, 0
      %p157 = por %p155, %p156
      %p158 = scmp.le.s32.totalorder 1, %s14
      %p159 = scmp.lt.s32.totalorder %s14, 3
      %p160 = pnand %p158, %p159
      %p161 = pneg %p160
      // Predicated region
      $region9: #{graph_attention_forward.1} parent=5 // pred_check
        _
      $region10: #{graph_attention_forward.1} parent=5 // pred_check_branch
        %163 = sbr.rel (%p160) target = $region12
      $region11: #{graph_attention_forward.1} parent=5 // pred_region
        %s164 = ssub.s32 %s14, 1
        // Predicated region
        $region13: #{graph_attention_forward.1} parent=11 // pred_check
          %p165 = pneg %p61
        $region14: #{graph_attention_forward.1} parent=11 // pred_check_branch
          %167 = sbr.rel (%p165) target = $region16
        $region15: #{graph_attention_forward.1} parent=11 // pred_region
          _
        $region16: #{graph_attention_forward.1} parent=11 // pred_fallthru
          _
        // Predicated region
        $region17: #{graph_attention_forward.1} parent=11 // pred_check
          %p168 = pneg %p82
        $region18: #{graph_attention_forward.1} parent=11 // pred_check_branch
          %170 = sbr.rel (%p168) target = $region20
        $region19: #{graph_attention_forward.1} parent=11 // pred_region
          _
        $region20: #{graph_attention_forward.1} parent=11 // pred_fallthru
          _
        // Predicated region
        $region21: #{graph_attention_forward.1} parent=11 // pred_check
          %p171 = pneg %p103
        $region22: #{graph_attention_forward.1} parent=11 // pred_check_branch
          %173 = sbr.rel (%p171) target = $region24
        $region23: #{graph_attention_forward.1} parent=11 // pred_region
          _
        $region24: #{graph_attention_forward.1} parent=11 // pred_fallthru
          _
        // Predicated region
        $region25: #{graph_attention_forward.1} parent=11 // pred_check
          %p174 = pneg %p124
        $region26: #{graph_attention_forward.1} parent=11 // pred_check_branch
          %176 = sbr.rel (%p174) target = $region28
        $region27: #{graph_attention_forward.1} parent=11 // pred_region
          _
        $region28: #{graph_attention_forward.1} parent=11 // pred_fallthru
          _
      $region12: #{graph_attention_forward.1} parent=5 // pred_fallthru
        _
      %p177 = scmp.lt.s32.totalorder %s14, 2
      // Predicated region
      $region29: #{graph_attention_forward.1} parent=5 // pred_check
        %p178 = pneg %p177
      $region30: #{graph_attention_forward.1} parent=5 // pred_check_branch
        %180 = sbr.rel (%p178) target = $region32
      $region31: #{graph_attention_forward.1} parent=5 // pred_region
        // Predicated region
        $region33: #{graph_attention_forward.1} parent=31 // pred_check
          %p181 = pneg %p34
        $region34: #{graph_attention_forward.1} parent=31 // pred_check_branch
          %183 = sbr.rel (%p181) target = $region36
        $region35: #{graph_attention_forward.1} parent=31 // pred_region
          %p184 = scmp.lt.s32.totalorder %s14, 1
          %s185 = scalar_select %p184, %s14, 1
          %s186 = smul.addr %s185, 2
          %s187 = smul.addr %s186, 8
          %s188 = scalar_lea.vmem %s0, %s187
        $region36: #{graph_attention_forward.1} parent=31 // pred_fallthru
          _
      $region32: #{graph_attention_forward.1} parent=5 // pred_fallthru
        _
      %p189 = scmp.le.s32.totalorder 1, %s14
      %p190 = scmp.lt.s32.totalorder %s14, 3
      %p191 = pnand %p189, %p190
      %p192 = pneg %p191
      // Predicated region
      $region37: #{graph_attention_forward.1} parent=5 // pred_check
        _
      $region38: #{graph_attention_forward.1} parent=5 // pred_check_branch
        %194 = sbr.rel (%p191) target = $region40
      $region39: #{graph_attention_forward.1} parent=5 // pred_region
        %s195 = ssub.s32 %s14, 1
        %p196 = scmp.lt.s32.totalorder %s19, 1
        %s197 = scalar_select %p196, %s19, 1
        %s198 = smul.addr %s197, 2
        %s199 = smul.addr %s198, 8
        %s200 = scalar_lea.vmem %s0, %s199
        %p201 = pneg %p40
        %p202 = pneg %p37
        %p203 = pneg %p61
        %p204 = pneg %p58
        %p205 = pneg %p82
        %p206 = pneg %p79
        %p207 = pneg %p103
        %p208 = pneg %p100
        %p209 = pneg %p124
        %p210 = pneg %p121
        %p211 = pneg %p150
        %p212 = pneg %p147
        %s213 = sand.u32 %s137, 1
        %s214 = scalar_lea.sflag [#allocation3], %s213
        %s215 = sand.u32 %s137, 1
        %s216 = smul.addr %s215, 8
        %s217 = scalar_lea.vmem [#allocation2], %s216
        %p218 = scmp.lt.s32.totalorder %s19, 1
        %s219 = scalar_select %p218, %s19, 1
        %s220 = smul.addr %s219, 2
        %s221 = smul.addr %s220, 8
        %s222 = scalar_lea.vmem %s0, %s221
        %v223 = vld [vmem:[%s222] sm:$0xff]
        %v224 = vld [vmem:[%s222 + $0x8] sm:$0xff]
        %v225 = vld [vmem:[%s1] sm:$0xff]
        %vm226 = vcmask 64512
        %v228 = vsel %vm226, %v225, 0
        %v231 = vsel %vm226, %v223, 0
        %v234 = vsel %vm226, %v224, 0
        %236 = vmatprep.subr.mxu0 0.0
        %237 = vmatpush1.xpose.msra.mxu0 %v231
        %238 = vmatprep.subr.mxu0 0.0
        %239 = vmatpush1.xpose.msra.mxu0 %v234
        %240 = vmatprep.subr.mxu0 0.0
        %241 = vmatpush1.xpose.msra.mxu0 0.0
        %242 = vmatprep.subr.mxu0 0.0
        %243 = vmatpush1.xpose.msra.mxu0 0.0
        %244 = vmatprep.subr.mxu0 0.0
        %245 = vmatpush1.xpose.msra.mxu0 0.0
        %246 = vmatprep.subr.mxu0 0.0
        %247 = vmatpush1.xpose.msra.mxu0 0.0
        %248 = vmatprep.subr.mxu0 0.0
        %249 = vmatpush1.xpose.msra.mxu0 0.0
        %250 = vmatprep.subr.mxu0 0.0
        %251 = vmatpush1.xpose.msra.mxu0 0.0
        %252 = vmatprep.subr.mxu0 0.0
        %253 = vmatpush1.xpose.msra.mxu0 0.0
        %254 = vmatprep.subr.mxu0 0.0
        %255 = vmatpush1.xpose.msra.mxu0 0.0
        %256 = vmatprep.subr.mxu0 0.0
        %257 = vmatpush1.xpose.msra.mxu0 0.0
        %258 = vmatprep.subr.mxu0 0.0
        %259 = vmatpush1.xpose.msra.mxu0 0.0
        %260 = vmatprep.subr.mxu0 0.0
        %261 = vmatpush1.xpose.msra.mxu0 0.0
        %262 = vmatprep.subr.mxu0 0.0
        %263 = vmatpush1.xpose.msra.mxu0 0.0
        %264 = vmatprep.subr.mxu0 0.0
        %265 = vmatpush1.xpose.msra.mxu0 0.0
        %266 = vmatprep.subr.mxu0 0.0
        %267 = vmatpush1.xpose.msra.mxu0 0.0
        %268 = vmatprep.subr.mxu0 0.0
        %269 = vmatpush1.xpose.msra.mxu0 0.0
        %270 = vmatprep.subr.mxu0 0.0
        %271 = vmatpush1.xpose.msra.mxu0 0.0
        %272 = vmatprep.subr.mxu0 0.0
        %273 = vmatpush1.xpose.msra.mxu0 0.0
        %274 = vmatprep.subr.mxu0 0.0
        %275 = vmatpush1.xpose.msra.mxu0 0.0
        %276 = vmatprep.subr.mxu0 0.0
        %277 = vmatpush1.xpose.msra.mxu0 0.0
        %278 = vmatprep.subr.mxu0 0.0
        %279 = vmatpush1.xpose.msra.mxu0 0.0
        %280 = vmatprep.subr.mxu0 0.0
        %281 = vmatpush1.xpose.msra.mxu0 0.0
        %282 = vmatprep.subr.mxu0 0.0
        %283 = vmatpush1.xpose.msra.mxu0 0.0
        %284 = vmatprep.subr.mxu0 0.0
        %285 = vmatpush1.xpose.msra.mxu0 0.0
        %286 = vmatprep.subr.mxu0 0.0
        %287 = vmatpush1.xpose.msra.mxu0 0.0
        %288 = vmatprep.subr.mxu0 0.0
        %289 = vmatpush1.xpose.msra.mxu0 0.0
        %290 = vmatprep.subr.mxu0 0.0
        %291 = vmatpush1.xpose.msra.mxu0 0.0
        %292 = vmatprep.subr.mxu0 0.0
        %293 = vmatpush1.xpose.msra.mxu0 0.0
        %294 = vmatprep.subr.mxu0 0.0
        %295 = vmatpush1.xpose.msra.mxu0 0.0
        %296 = vmatprep.subr.mxu0 0.0
        %297 = vmatpush1.xpose.msra.mxu0 0.0
        %298 = vmatprep.subr.mxu0 0.0
        %299 = vmatpush1.xpose.msra.mxu0 0.0
        %300 = vmatprep.mubr.f32.mxu0 0.0
        %301 = vmatmul.mubr.f32.gmra.mrb[0].mxu0 %v228
        %v302 = vpop.f32.mrb[0].mxu0
        %v303 = vadd.f32 0.0, %v302
        %v304 = vpop.f32.mrb[0].mxu0
        %305 = vdwg.mxu0
        %v306 = vld [vmem:[%s2] sm:$0xff]
        %v308 = vsel %vm226, %v306, 0
        %310 = vmatprep.subr.mxu0 0.0
        %311 = vmatpush1.xpose.msra.mxu0 %v231
        %312 = vmatprep.subr.mxu0 0.0
        %313 = vmatpush1.xpose.msra.mxu0 %v234
        %314 = vmatprep.subr.mxu0 0.0
        %315 = vmatpush1.xpose.msra.mxu0 0.0
        %316 = vmatprep.subr.mxu0 0.0
        %317 = vmatpush1.xpose.msra.mxu0 0.0
        %318 = vmatprep.subr.mxu0 0.0
        %319 = vmatpush1.xpose.msra.mxu0 0.0
        %320 = vmatprep.subr.mxu0 0.0
        %321 = vmatpush1.xpose.msra.mxu0 0.0
        %322 = vmatprep.subr.mxu0 0.0
        %323 = vmatpush1.xpose.msra.mxu0 0.0
        %324 = vmatprep.subr.mxu0 0.0
        %325 = vmatpush1.xpose.msra.mxu0 0.0
        %326 = vmatprep.subr.mxu0 0.0
        %327 = vmatpush1.xpose.msra.mxu0 0.0
        %328 = vmatprep.subr.mxu0 0.0
        %329 = vmatpush1.xpose.msra.mxu0 0.0
        %330 = vmatprep.subr.mxu0 0.0
        %331 = vmatpush1.xpose.msra.mxu0 0.0
        %332 = vmatprep.subr.mxu0 0.0
        %333 = vmatpush1.xpose.msra.mxu0 0.0
        %334 = vmatprep.subr.mxu0 0.0
        %335 = vmatpush1.xpose.msra.mxu0 0.0
        %336 = vmatprep.subr.mxu0 0.0
        %337 = vmatpush1.xpose.msra.mxu0 0.0
        %338 = vmatprep.subr.mxu0 0.0
        %339 = vmatpush1.xpose.msra.mxu0 0.0
        %340 = vmatprep.subr.mxu0 0.0
        %341 = vmatpush1.xpose.msra.mxu0 0.0
        %342 = vmatprep.subr.mxu0 0.0
        %343 = vmatpush1.xpose.msra.mxu0 0.0
        %344 = vmatprep.subr.mxu0 0.0
        %345 = vmatpush1.xpose.msra.mxu0 0.0
        %346 = vmatprep.subr.mxu0 0.0
        %347 = vmatpush1.xpose.msra.mxu0 0.0
        %348 = vmatprep.subr.mxu0 0.0
        %349 = vmatpush1.xpose.msra.mxu0 0.0
        %350 = vmatprep.subr.mxu0 0.0
        %351 = vmatpush1.xpose.msra.mxu0 0.0
        %352 = vmatprep.subr.mxu0 0.0
        %353 = vmatpush1.xpose.msra.mxu0 0.0
        %354 = vmatprep.subr.mxu0 0.0
        %355 = vmatpush1.xpose.msra.mxu0 0.0
        %356 = vmatprep.subr.mxu0 0.0
        %357 = vmatpush1.xpose.msra.mxu0 0.0
        %358 = vmatprep.subr.mxu0 0.0
        %359 = vmatpush1.xpose.msra.mxu0 0.0
        %360 = vmatprep.subr.mxu0 0.0
        %361 = vmatpush1.xpose.msra.mxu0 0.0
        %362 = vmatprep.subr.mxu0 0.0
        %363 = vmatpush1.xpose.msra.mxu0 0.0
        %364 = vmatprep.subr.mxu0 0.0
        %365 = vmatpush1.xpose.msra.mxu0 0.0
        %366 = vmatprep.subr.mxu0 0.0
        %367 = vmatpush1.xpose.msra.mxu0 0.0
        %368 = vmatprep.subr.mxu0 0.0
        %369 = vmatpush1.xpose.msra.mxu0 0.0
        %370 = vmatprep.subr.mxu0 0.0
        %371 = vmatpush1.xpose.msra.mxu0 0.0
        %372 = vmatprep.subr.mxu0 0.0
        %373 = vmatpush1.xpose.msra.mxu0 0.0
        %374 = vmatprep.mubr.f32.mxu0 0.0
        %375 = vmatmul.mubr.f32.gmra.mrb[0].mxu0 %v308
        %v376 = vpop.f32.mrb[0].mxu0
        %v377 = vadd.f32 0.0, %v376
        %v378 = vpop.f32.mrb[0].mxu0
        %379 = vdwg.mxu0
        %v381 = vcombine.high %v377, %v377
        %v383 = vunpack.c.l.s4 1966171168
        %v384 = vunpack.c.0.s8 %v383
        %v385 = vlaneseq
        %v386 = vshrl.u32 %v385, 7
        %v387 = vsub.s32 %v384, %v386
        %v388 = vrot.slane %v377, %v387
        %v390 = vunpack.c.l.s4 1966171168
        %v391 = vunpack.c.0.s8 %v390
        %v392 = vlaneseq
        %v393 = vshrl.u32 %v392, 7
        %v394 = vsub.s32 %v391, %v393
        %v395 = vrot.slane %v381, %v394
        %v396 = vcombine.high %v388, %v388
        %v397 = vcombine.high %v395, %v395
        %v399 = vunpack.c.l.s4 1966171168
        %v400 = vunpack.c.0.s8 %v399
        %v401 = vlaneseq
        %v402 = vshrl.u32 %v401, 7
        %v403 = vsub.s32 %v400, %v402
        %v404 = vrot.slane %v388, %v403
        %v406 = vunpack.c.l.s4 1966171168
        %v407 = vunpack.c.0.s8 %v406
        %v408 = vlaneseq
        %v409 = vshrl.u32 %v408, 7
        %v410 = vsub.s32 %v407, %v409
        %v411 = vrot.slane %v395, %v410
        %v413 = vunpack.c.l.s4 1966171168
        %v414 = vunpack.c.0.s8 %v413
        %v415 = vlaneseq
        %v416 = vshrl.u32 %v415, 7
        %v417 = vsub.s32 %v414, %v416
        %v418 = vrot.slane %v396, %v417
        %v420 = vunpack.c.l.s4 1966171168
        %v421 = vunpack.c.0.s8 %v420
        %v422 = vlaneseq
        %v423 = vshrl.u32 %v422, 7
        %v424 = vsub.s32 %v421, %v423
        %v425 = vrot.slane %v397, %v424
        %v426 = vcombine.high %v404, %v404
        %v427 = vcombine.high %v411, %v411
        %v428 = vcombine.high %v418, %v418
        %v429 = vcombine.high %v425, %v425
        %v430 = vlaneseq
        %v431 = vshrl.u32 %v430, 7
        %v432 = vsub.s32 0, %v431
        %v433 = vrot.slane %v404, %v432
        %v434 = vlaneseq
        %v435 = vshrl.u32 %v434, 7
        %v436 = vsub.s32 0, %v435
        %v437 = vrot.slane %v418, %v436
        %v438 = vlaneseq
        %v439 = vshrl.u32 %v438, 7
        %v440 = vsub.s32 0, %v439
        %v441 = vrot.slane %v426, %v440
        %v442 = vlaneseq
        %v443 = vshrl.u32 %v442, 7
        %v444 = vsub.s32 0, %v443
        %v445 = vrot.slane %v428, %v444
        %v446 = vlaneseq
        %v447 = vshrl.u32 %v446, 7
        %v448 = vsub.s32 0, %v447
        %v449 = vrot.slane %v411, %v448
        %v450 = vlaneseq
        %v451 = vshrl.u32 %v450, 7
        %v452 = vsub.s32 0, %v451
        %v453 = vrot.slane %v425, %v452
        %v454 = vlaneseq
        %v455 = vshrl.u32 %v454, 7
        %v456 = vsub.s32 0, %v455
        %v457 = vrot.slane %v427, %v456
        %v458 = vlaneseq
        %v459 = vshrl.u32 %v458, 7
        %v460 = vsub.s32 0, %v459
        %v461 = vrot.slane %v429, %v460
        %v470 = vadd.f32 %v433, %v303
        %v471 = vadd.f32 %v437, %v303
        %v472 = vadd.f32 %v441, %v303
        %v473 = vadd.f32 %v445, %v303
        %v474 = vadd.f32 %v449, %v303
        %v475 = vadd.f32 %v453, %v303
        %v476 = vadd.f32 %v457, %v303
        %v477 = vadd.f32 %v461, %v303
        %vm478 = vcmp.ge.f32.partialorder %v470, 0.0
        %vm479 = vcmp.ge.f32.partialorder %v471, 0.0
        %vm480 = vcmp.ge.f32.partialorder %v472, 0.0
        %vm481 = vcmp.ge.f32.partialorder %v473, 0.0
        %vm482 = vcmp.ge.f32.partialorder %v474, 0.0
        %vm483 = vcmp.ge.f32.partialorder %v475, 0.0
        %vm484 = vcmp.ge.f32.partialorder %v476, 0.0
        %vm485 = vcmp.ge.f32.partialorder %v477, 0.0
        %v486 = vmul.f32 %v470, 0.2
        %v487 = vmul.f32 %v471, 0.2
        %v488 = vmul.f32 %v472, 0.2
        %v489 = vmul.f32 %v473, 0.2
        %v490 = vmul.f32 %v474, 0.2
        %v491 = vmul.f32 %v475, 0.2
        %v492 = vmul.f32 %v476, 0.2
        %v493 = vmul.f32 %v477, 0.2
        %v494 = vsel %vm478, %v470, %v486
        %v495 = vsel %vm479, %v471, %v487
        %v496 = vsel %vm480, %v472, %v488
        %v497 = vsel %vm481, %v473, %v489
        %v498 = vsel %vm482, %v474, %v490
        %v499 = vsel %vm483, %v475, %v491
        %v500 = vsel %vm484, %v476, %v492
        %v501 = vsel %vm485, %v477, %v493
        %v502 = vld [vmem:[%s3] sm:$0x1]
        %v504 = vlaneseq
        %v505 = vshrl.u32 %v504, 7
        %v506 = vsub.s32 0, %v505
        %v507 = vrot.slane %v502, %v506
        %v509 = vmul.f32 %v494, %v507
        %v510 = vmul.f32 %v495, %v507
        %v511 = vmul.f32 %v496, %v507
        %v512 = vmul.f32 %v497, %v507
        %v513 = vmul.f32 %v498, %v507
        %v514 = vmul.f32 %v499, %v507
        %v515 = vmul.f32 %v500, %v507
        %v516 = vmul.f32 %v501, %v507
        %vm517 = vcmask 130048
        %v518 = vsel %vm517, %v509, 0.0
        %519 = vadd.xlane.f32.xlu0 %v518
        %v520 = vpop.xlane.xlu0 %519
        %v521 = vsel %vm517, %v510, 0.0
        %522 = vadd.xlane.f32.xlu0 %v521
        %v523 = vpop.xlane.xlu0 %522
        %v524 = vsel %vm517, %v511, 0.0
        %525 = vadd.xlane.f32.xlu0 %v524
        %v526 = vpop.xlane.xlu0 %525
        %v527 = vsel %vm517, %v512, 0.0
        %528 = vadd.xlane.f32.xlu0 %v527
        %v529 = vpop.xlane.xlu0 %528
        %v530 = vsel %vm517, %v513, 0.0
        %531 = vadd.xlane.f32.xlu0 %v530
        %v532 = vpop.xlane.xlu0 %531
        %v533 = vsel %vm517, %v514, 0.0
        %534 = vadd.xlane.f32.xlu0 %v533
        %v535 = vpop.xlane.xlu0 %534
        %v536 = vsel %vm517, %v515, 0.0
        %537 = vadd.xlane.f32.xlu0 %v536
        %v538 = vpop.xlane.xlu0 %537
        %v539 = vsel %vm517, %v516, 0.0
        %540 = vadd.xlane.f32.xlu0 %v539
        %v541 = vpop.xlane.xlu0 %540
        %v542 = vld [vmem:[%s4] sm:$0xff]
        %vm543 = vcmp.gt.f32.partialorder %v542, 0.0
        %v552 = vlaneseq
        %v553 = vand.u32 %v552, 127
        %v554 = vlaneseq
        %v555 = vshrl.u32 %v554, 7
        %v556 = vsub.s32 %v553, %v555
        %v557 = vrot.slane %v520, %v556
        %v558 = vlaneseq
        %v559 = vshrl.u32 %v558, 7
        %v560 = vsub.s32 %v553, %v559
        %v561 = vrot.slane %v523, %v560
        %v562 = vlaneseq
        %v563 = vshrl.u32 %v562, 7
        %v564 = vsub.s32 %v553, %v563
        %v565 = vrot.slane %v526, %v564
        %v566 = vlaneseq
        %v567 = vshrl.u32 %v566, 7
        %v568 = vsub.s32 %v553, %v567
        %v569 = vrot.slane %v529, %v568
        %v570 = vlaneseq
        %v571 = vshrl.u32 %v570, 7
        %v572 = vsub.s32 %v553, %v571
        %v573 = vrot.slane %v532, %v572
        %v574 = vlaneseq
        %v575 = vshrl.u32 %v574, 7
        %v576 = vsub.s32 %v553, %v575
        %v577 = vrot.slane %v535, %v576
        %v578 = vlaneseq
        %v579 = vshrl.u32 %v578, 7
        %v580 = vsub.s32 %v553, %v579
        %v581 = vrot.slane %v538, %v580
        %v582 = vlaneseq
        %v583 = vshrl.u32 %v582, 7
        %v584 = vsub.s32 %v553, %v583
        %v585 = vrot.slane %v541, %v584
        %vm586 = vcmask 1041409
        %v587 = vsel %vm586, %v561, %v557
        %vm588 = vcmask 1042434
        %v589 = vsel %vm588, %v565, %v587
        %vm590 = vcmask 1043459
        %v591 = vsel %vm590, %v569, %v589
        %vm592 = vcmask 1044484
        %v593 = vsel %vm592, %v573, %v591
        %vm594 = vcmask 1045509
        %v595 = vsel %vm594, %v577, %v593
        %vm596 = vcmask 1046534
        %v597 = vsel %vm596, %v581, %v595
        %vm598 = vcmask 1047559
        %v599 = vsel %vm598, %v585, %v597
        %v601 = vsel %vm543, %v599, -9e+15
        %v602 = vsel %vm226, %v601, -inf
        %603 = vmax.xlane.f32.xlu0 %v602
        %v604 = vpop.xlane.xlu0 %603
        %v605 = vsub.f32 %v601, %v604
        %v606 = vmul.f32 %v605, 1.442695
        %v607 = vpow.pop %v606
        %v608 = vsel %vm226, %v607, 0.0
        %609 = vadd.xlane.f32.xlu0 %v608
        %v610 = vpop.xlane.xlu0 %609
        %v611 = vrcp.pop %v610
        %v612 = vmul.f32 %v607, %v611
        %v614 = vsel %vm226, %v612, 0
        %616 = vmatprep.subr.mxu0 0.0
        %617 = vmatpush1.msra.mxu0 %v377
        %618 = vmatprep.subr.mxu0 0.0
        %619 = vmatpush1.msra.mxu0 0.0
        %620 = vmatprep.subr.mxu0 0.0
        %621 = vmatpush1.msra.mxu0 0.0
        %622 = vmatprep.subr.mxu0 0.0
        %623 = vmatpush1.msra.mxu0 0.0
        %624 = vmatprep.subr.mxu0 0.0
        %625 = vmatpush1.msra.mxu0 0.0
        %626 = vmatprep.subr.mxu0 0.0
        %627 = vmatpush1.msra.mxu0 0.0
        %628 = vmatprep.subr.mxu0 0.0
        %629 = vmatpush1.msra.mxu0 0.0
        %630 = vmatprep.subr.mxu0 0.0
        %631 = vmatpush1.msra.mxu0 0.0
        %632 = vmatprep.subr.mxu0 0.0
        %633 = vmatpush1.msra.mxu0 0.0
        %634 = vmatprep.subr.mxu0 0.0
        %635 = vmatpush1.msra.mxu0 0.0
        %636 = vmatprep.subr.mxu0 0.0
        %637 = vmatpush1.msra.mxu0 0.0
        %638 = vmatprep.subr.mxu0 0.0
        %639 = vmatpush1.msra.mxu0 0.0
        %640 = vmatprep.subr.mxu0 0.0
        %641 = vmatpush1.msra.mxu0 0.0
        %642 = vmatprep.subr.mxu0 0.0
        %643 = vmatpush1.msra.mxu0 0.0
        %644 = vmatprep.subr.mxu0 0.0
        %645 = vmatpush1.msra.mxu0 0.0
        %646 = vmatprep.subr.mxu0 0.0
        %647 = vmatpush1.msra.mxu0 0.0
        %648 = vmatprep.subr.mxu0 0.0
        %649 = vmatpush1.msra.mxu0 0.0
        %650 = vmatprep.subr.mxu0 0.0
        %651 = vmatpush1.msra.mxu0 0.0
        %652 = vmatprep.subr.mxu0 0.0
        %653 = vmatpush1.msra.mxu0 0.0
        %654 = vmatprep.subr.mxu0 0.0
        %655 = vmatpush1.msra.mxu0 0.0
        %656 = vmatprep.subr.mxu0 0.0
        %657 = vmatpush1.msra.mxu0 0.0
        %658 = vmatprep.subr.mxu0 0.0
        %659 = vmatpush1.msra.mxu0 0.0
        %660 = vmatprep.subr.mxu0 0.0
        %661 = vmatpush1.msra.mxu0 0.0
        %662 = vmatprep.subr.mxu0 0.0
        %663 = vmatpush1.msra.mxu0 0.0
        %664 = vmatprep.subr.mxu0 0.0
        %665 = vmatpush1.msra.mxu0 0.0
        %666 = vmatprep.subr.mxu0 0.0
        %667 = vmatpush1.msra.mxu0 0.0
        %668 = vmatprep.subr.mxu0 0.0
        %669 = vmatpush1.msra.mxu0 0.0
        %670 = vmatprep.subr.mxu0 0.0
        %671 = vmatpush1.msra.mxu0 0.0
        %672 = vmatprep.subr.mxu0 0.0
        %673 = vmatpush1.msra.mxu0 0.0
        %674 = vmatprep.subr.mxu0 0.0
        %675 = vmatpush1.msra.mxu0 0.0
        %676 = vmatprep.subr.mxu0 0.0
        %677 = vmatpush1.msra.mxu0 0.0
        %678 = vmatprep.subr.mxu0 0.0
        %679 = vmatpush1.msra.mxu0 0.0
        %680 = vmatprep.mubr.f32.mxu0 0.0
        %681 = vmatmul.mubr.f32.gmra.mrb[0].mxu0 %v614
        %v682 = vpop.f32.mrb[0].mxu0
        %v683 = vadd.f32 0.0, %v682
        %v684 = vpop.f32.mrb[0].mxu0
        %685 = vdwg.mxu0
        %686 = vst.msk [vmem:[%s217] sm:$0xff] %vm517, %v683
        %s687 = sand.u32 %s137, 1
        %s688 = scalar_lea.sflag [#allocation3], %s687
        %s689 = sand.u32 %s137, 1
        %s690 = smul.addr %s689, 8
        %s691 = scalar_lea.vmem [#allocation2], %s690
        // Predicated region
        $region41: #{graph_attention_forward.1} parent=39 // pred_check
          %p692 = pneg %p147
        $region42: #{graph_attention_forward.1} parent=39 // pred_check_branch
          %694 = sbr.rel (%p692) target = $region44
        $region43: #{graph_attention_forward.1} parent=39 // pred_region
          %s696 = ssub.s32 128, 128
          %697 = vsyncadd %s688, %s696
          %s698 = smul.addr %s19, 128
          %s699 = scalar_lea.hbm %s5, %s698
          %s701 = sshll.u32 %s691, 4
          %s702 = int_to_ptr.vmem [resolvable:$true] %s701
          %704 = dma.vmem_to_hbm [thread:$0]  %s702, 128, %s699, %s688
        $region44: #{graph_attention_forward.1} parent=39 // pred_fallthru
          _
      $region40: #{graph_attention_forward.1} parent=5 // pred_fallthru
        _
      %p705 = scmp.le.s32.totalorder 2, %s14
      // Predicated region
      $region45: #{graph_attention_forward.1} parent=5 // pred_check
        %p706 = pneg %p705
      $region46: #{graph_attention_forward.1} parent=5 // pred_check_branch
        %708 = sbr.rel (%p706) target = $region48
      $region47: #{graph_attention_forward.1} parent=5 // pred_region
        %s709 = ssub.s32 %s14, 2
        // Predicated region
        $region49: #{graph_attention_forward.1} parent=47 // pred_check
          %p710 = pneg %p153
        $region50: #{graph_attention_forward.1} parent=47 // pred_check_branch
          %712 = sbr.rel (%p710) target = $region52
        $region51: #{graph_attention_forward.1} parent=47 // pred_region
          %s713 = sand.u32 %s138, 1
          %s714 = scalar_lea.sflag [#allocation3], %s713
          %s715 = sand.u32 %s138, 1
          %s716 = smul.addr %s715, 8
          %s717 = scalar_lea.vmem [#allocation2], %s716
          %718 = dma.done %s714, 128
        $region52: #{graph_attention_forward.1} parent=47 // pred_fallthru
          _
      $region48: #{graph_attention_forward.1} parent=5 // pred_fallthru
        _
    $region6: #{graph_attention_forward.1} parent=1 // loop_footer
      %s18 = sadd.s32 1, %s14
    $region7: #{graph_attention_forward.1} parent=1 // loop_footer_branch
      %13 = sbr.rel target = $region3
    $region8: #{graph_attention_forward.1} parent=1 // loop_exit
      _
    %719 = vsyncpa [#allocation3], 1
    %s720 = scalar_lea.sflag [#allocation3], 1
    %721 = vsyncpa %s720, 1

</llo_original>
